<compile_context>
chip_gen: v7x
topology: tpu7x:2x2x1
jax: 0.10.0
libtpu: 0.0.40
codegen_flags: <defaults>
</compile_context>

<pallas_src>
import math

import jax
import jax.numpy as jnp
from jax.experimental import pallas as pl
from jax.experimental.pallas import tpu as pltpu


def encoder_kernel(x_ref,
                   w1_ref, b1_ref,
                   w2_ref, b2_ref,
                   w3_ref, b3_ref,
                   wh_ref, bh_ref,
                   out_ref):
    # fc1 + relu  (in_eff -> 128)
    h = jnp.dot(x_ref[...], w1_ref[...],
                preferred_element_type=jnp.float32) + b1_ref[...]
    h = jnp.maximum(h, 0.0)
    # fc2 + relu  (128 -> 128, cols 64..127 are zero-padded)
    h = jnp.dot(h, w2_ref[...],
                preferred_element_type=jnp.float32) + b2_ref[...]
    h = jnp.maximum(h, 0.0)
    # fc3 + relu  (128 -> 128, cols 32..127 are zero-padded)
    h = jnp.dot(h, w3_ref[...],
                preferred_element_type=jnp.float32) + b3_ref[...]
    h = jnp.maximum(h, 0.0)
    # fused heads: [z_mean | z_log_var | recon | zero-pad] in one wide matmul
    out_ref[...] = (jnp.dot(h, wh_ref[...],
                            preferred_element_type=jnp.float32)
                    + bh_ref[...]).astype(out_ref.dtype)


def _round_up(x, m):
    return ((x + m - 1) // m) * m


def encoder_forward(x, params, *, max_batch_tile=1024):
    """x: (B, input_shape) float32. params: dict of weights/biases.

    Returns (z_mean, z_log_var, recon) exactly like the PyTorch module.
    """
    B, in_dim = x.shape
    latent_dim = params["wm"].shape[1]

    H1, H2, H3 = 128, 64, 32           # layer widths
    H2P, H3P = 128, 128                # lane-dense padded widths

    # --- optional K-pad of the fc1 contraction dim (only when it helps) ----
    if in_dim > 128 and in_dim % 128 != 0:
        in_eff = _round_up(in_dim, 128)
    else:
        in_eff = in_dim

    # --- lane-dense padding of hidden layers -------------------------------
    w1 = params["w1"]                                    # (in_dim, 128)
    b1 = params["b1"]                                    # (1, 128)
    if in_eff != in_dim:
        w1 = jnp.pad(w1, ((0, in_eff - in_dim), (0, 0)))
    w2 = jnp.pad(params["w2"], ((0, 0), (0, H2P - H2)))  # (128, 128)
    b2 = jnp.pad(params["b2"], ((0, 0), (0, H2P - H2)))  # (1, 128)
    w3 = jnp.pad(params["w3"], ((0, H2P - H2), (0, H3P - H3)))  # (128, 128)
    b3 = jnp.pad(params["b3"], ((0, 0), (0, H3P - H3)))  # (1, 128)

    # --- fuse the three heads into one wide, lane-dense matmul -------------
    w_heads = jnp.concatenate([params["wm"], params["wv"], params["w4"]],
                              axis=1)                    # (32, 2*L + in_dim)
    b_heads = jnp.concatenate([params["bm"], params["bv"], params["b4"]],
                              axis=1)                    # (1,  2*L + in_dim)
    n_heads = w_heads.shape[1]
    head_pad = max(128, _round_up(n_heads, 128))         # lane-dense output
    w_heads = jnp.pad(w_heads,
                      ((0, H3P - H3), (0, head_pad - n_heads)))  # (128, head_pad)
    b_heads = jnp.pad(b_heads, ((0, 0), (0, head_pad - n_heads)))

    # --- batch tiling -------------------------------------------------------
    # Aim for >=2 grid steps (v7x has 2 TensorCores sharing the parallel
    # axis), tb a multiple of 8 (f32 sublane), capped by max_batch_tile.
    tb = min(max_batch_tile, max(8, pl.cdiv(B, 2)))
    tb = _round_up(tb, 8)

    # Working-set estimate (bytes): double-buffered x/out tiles, resident
    # weights (2 pipeline buffers each), plus live f32 intermediates.
    weight_bytes = 4 * (in_eff * H1 + H1
                        + H2P * H2P + H2P
                        + H2P * H3P + H3P
                        + H3P * head_pad + head_pad)

    def vmem_budget(tb_):
        io = 2 * tb_ * (in_eff + head_pad) * 4
        interm = tb_ * (H1 + H2P + H3P + head_pad) * 4
        return io + 2 * weight_bytes + interm

    VMEM_SOFT_CAP = 24 << 20            # v7x-safe (64 MiB phys / 32 MiB scoped)
    while tb > 8 and vmem_budget(tb) > VMEM_SOFT_CAP:
        tb = max(8, _round_up(tb // 2, 8))
    vmem_limit = int(min(max(vmem_budget(tb) + (4 << 20), 32 << 20), 64 << 20))

    b_pad = _round_up(B, tb)
    x_p = x
    if b_pad != B or in_eff != in_dim:
        x_p = jnp.pad(x, ((0, b_pad - B), (0, in_eff - in_dim)))
    grid = (b_pad // tb,)

    # --- specs --------------------------------------------------------------
    def resident(i):            # weights/biases: same block every step
        return (0, 0)

    in_specs = [
        pl.BlockSpec((tb, in_eff), lambda i: (i, 0)),          # x tile
        pl.BlockSpec(w1.shape, resident),
        pl.BlockSpec(b1.shape, resident),
        pl.BlockSpec(w2.shape, resident),
        pl.BlockSpec(b2.shape, resident),
        pl.BlockSpec(w3.shape, resident),
        pl.BlockSpec(b3.shape, resident),
        pl.BlockSpec(w_heads.shape, resident),
        pl.BlockSpec(b_heads.shape, resident),
    ]
    out_specs = pl.BlockSpec((tb, head_pad), lambda i: (i, 0))
    out_shape = jax.ShapeDtypeStruct((b_pad, head_pad), jnp.float32)

    flat_args = (x_p, w1, b1, w2, b2, w3, b3, w_heads, b_heads)

    # advisory cost estimate for XLA's scheduler
    flops = 2 * b_pad * (in_eff * H1 + H2P * H2P + H2P * H3P + H3P * head_pad)
    bytes_accessed = sum(int(a.size) * 4 for a in flat_args) \
        + int(b_pad) * int(head_pad) * 4
    cost = pl.CostEstimate(flops=flops, transcendentals=0,
                           bytes_accessed=bytes_accessed)

    fused = pl.pallas_call(
        encoder_kernel,
        out_shape=out_shape,
        grid=grid,
        in_specs=in_specs,
        out_specs=out_specs,
        compiler_params=pltpu.CompilerParams(
            dimension_semantics=("parallel",),
            vmem_limit_bytes=vmem_limit),
        cost_estimate=cost,
    )(*flat_args)

    # NOTE: for tiny heads the padded slab + slicing adds extra HBM passes;
    # consumers that can take the fused slab directly should do so.
    z_mean = fused[:B, :latent_dim]
    z_log_var = fused[:B, latent_dim:2 * latent_dim]
    recon = fused[:B, 2 * latent_dim:2 * latent_dim + in_dim]
    return z_mean, z_log_var, recon


def init_params(key, input_shape, latent_dim):
    """Deterministic init mimicking nn.Linear's uniform(-1/sqrt(fan_in), ...).

    Weights are stored transposed relative to PyTorch: (in, out).
    Biases are (1, out) rows for lane broadcasting inside the kernel.
    """
    dims = {
        "1": (input_shape, 128),
        "2": (128, 64),
        "3": (64, 32),
        "4": (32, input_shape),
        "m": (32, latent_dim),
        "v": (32, latent_dim),
    }
    params = {}
    for name, (fan_in, fan_out) in dims.items():
        key, kw, kb = jax.random.split(key, 3)
        bound = 1.0 / math.sqrt(fan_in)
        params[f"w{name}"] = jax.random.uniform(
            kw, (fan_in, fan_out), jnp.float32, minval=-bound, maxval=bound)
        params[f"b{name}"] = jax.random.uniform(
            kb, (1, fan_out), jnp.float32, minval=-bound, maxval=bound)
    return params


def reference_forward(x, params):
    """Plain-JAX reference for correctness checking."""
    h = jnp.maximum(x @ params["w1"] + params["b1"], 0.0)
    h = jnp.maximum(h @ params["w2"] + params["b2"], 0.0)
    h = jnp.maximum(h @ params["w3"] + params["b3"], 0.0)
    z_mean = h @ params["wm"] + params["bm"]
    z_log_var = h @ params["wv"] + params["bv"]
    recon = h @ params["w4"] + params["b4"]
    return z_mean, z_log_var, recon


if __name__ == "__main__":
    key = jax.random.PRNGKey(0)
    k_params, k_x = jax.random.split(key)

    B = 8
    INPUT_SHAPE = 16
    LATENT_DIM = 4

    params = init_params(k_params, INPUT_SHAPE, LATENT_DIM)
    x = jax.random.normal(k_x, (B, INPUT_SHAPE), jnp.float32)

    z_mean, z_log_var, recon = encoder_forward(x, params)
    jax.block_until_ready((z_mean, z_log_var, recon))

    # Sanity check against pure-JAX reference.
    rm, rv, rr = reference_forward(x, params)
    assert z_mean.shape == (B, LATENT_DIM)
    assert z_log_var.shape == (B, LATENT_DIM)
    assert recon.shape == (B, INPUT_SHAPE)
    assert jnp.allclose(z_mean, rm, atol=1e-5, rtol=1e-5)
    assert jnp.allclose(z_log_var, rv, atol=1e-5, rtol=1e-5)
    assert jnp.allclose(recon, rr, atol=1e-5, rtol=1e-5)

    print("KERNEL_OK")
</pallas_src>

<mosaic_0001>
module attributes {stable_mosaic.version = 11 : i64} {
  func.func @encoder_kernel(%arg0: i32, %arg1: memref<8x16xf32, #tpu.memory_space<vmem>>, %arg2: memref<16x128xf32, #tpu.memory_space<vmem>>, %arg3: memref<1x128xf32, #tpu.memory_space<vmem>>, %arg4: memref<128x128xf32, #tpu.memory_space<vmem>>, %arg5: memref<1x128xf32, #tpu.memory_space<vmem>>, %arg6: memref<128x128xf32, #tpu.memory_space<vmem>>, %arg7: memref<1x128xf32, #tpu.memory_space<vmem>>, %arg8: memref<128x128xf32, #tpu.memory_space<vmem>>, %arg9: memref<1x128xf32, #tpu.memory_space<vmem>>, %arg10: memref<8x128xf32, #tpu.memory_space<vmem>>) attributes {dimension_semantics = [#tpu.dimension_semantics<parallel>], iteration_bounds = array<i64: 1>, scalar_prefetch = 0 : i64, scratch_operands = 0 : i64, tpu.core_type = #tpu.core_type<tc>, window_params = [{transform_indices = @transform_0, window_bounds = array<i64: 8, 16>}, {pipeline_mode = #tpu.pipeline_mode<synchronous>, transform_indices = @transform_1, window_bounds = array<i64: 16, 128>}, {pipeline_mode = #tpu.pipeline_mode<synchronous>, transform_indices = @transform_2, window_bounds = array<i64: 1, 128>}, {pipeline_mode = #tpu.pipeline_mode<synchronous>, transform_indices = @transform_3, window_bounds = array<i64: 128, 128>}, {pipeline_mode = #tpu.pipeline_mode<synchronous>, transform_indices = @transform_4, window_bounds = array<i64: 1, 128>}, {pipeline_mode = #tpu.pipeline_mode<synchronous>, transform_indices = @transform_5, window_bounds = array<i64: 128, 128>}, {pipeline_mode = #tpu.pipeline_mode<synchronous>, transform_indices = @transform_6, window_bounds = array<i64: 1, 128>}, {pipeline_mode = #tpu.pipeline_mode<synchronous>, transform_indices = @transform_7, window_bounds = array<i64: 128, 128>}, {pipeline_mode = #tpu.pipeline_mode<synchronous>, transform_indices = @transform_8, window_bounds = array<i64: 1, 128>}, {transform_indices = @transform_9, window_bounds = array<i64: 8, 128>}]} {
    %c0 = arith.constant 0 : index
    %c0_0 = arith.constant 0 : index
    %0 = vector.load %arg1[%c0, %c0_0] : memref<8x16xf32, #tpu.memory_space<vmem>>, vector<8x16xf32>
    %c0_1 = arith.constant 0 : index
    %c0_2 = arith.constant 0 : index
    %1 = vector.load %arg2[%c0_1, %c0_2] : memref<16x128xf32, #tpu.memory_space<vmem>>, vector<16x128xf32>
    %cst = arith.constant dense<0.000000e+00> : vector<8x128xf32>
    %2 = tpu.matmul %0, %1, %cst {dimension_numbers = #tpu.dot_dimension_numbers<[1], [0], [0], [1], [0, 0, 1, 1], [], []>} : vector<8x16xf32>, vector<16x128xf32>, vector<8x128xf32> -> vector<8x128xf32>
    %c0_3 = arith.constant 0 : index
    %c0_4 = arith.constant 0 : index
    %3 = vector.load %arg3[%c0_3, %c0_4] : memref<1x128xf32, #tpu.memory_space<vmem>>, vector<1x128xf32>
    %4 = vector.broadcast %3 : vector<1x128xf32> to vector<8x128xf32>
    %5 = arith.addf %2, %4 : vector<8x128xf32>
    %cst_5 = arith.constant 0.000000e+00 : f32
    %6 = vector.broadcast %cst_5 : f32 to vector<8x128xf32>
    %7 = arith.maximumf %5, %6 : vector<8x128xf32>
    %c0_6 = arith.constant 0 : index
    %c0_7 = arith.constant 0 : index
    %8 = vector.load %arg4[%c0_6, %c0_7] : memref<128x128xf32, #tpu.memory_space<vmem>>, vector<128x128xf32>
    %cst_8 = arith.constant dense<0.000000e+00> : vector<8x128xf32>
    %9 = tpu.matmul %7, %8, %cst_8 {dimension_numbers = #tpu.dot_dimension_numbers<[1], [0], [0], [1], [0, 0, 1, 1], [], []>} : vector<8x128xf32>, vector<128x128xf32>, vector<8x128xf32> -> vector<8x128xf32>
    %c0_9 = arith.constant 0 : index
    %c0_10 = arith.constant 0 : index
    %10 = vector.load %arg5[%c0_9, %c0_10] : memref<1x128xf32, #tpu.memory_space<vmem>>, vector<1x128xf32>
    %11 = vector.broadcast %10 : vector<1x128xf32> to vector<8x128xf32>
    %12 = arith.addf %9, %11 : vector<8x128xf32>
    %cst_11 = arith.constant 0.000000e+00 : f32
    %13 = vector.broadcast %cst_11 : f32 to vector<8x128xf32>
    %14 = arith.maximumf %12, %13 : vector<8x128xf32>
    %c0_12 = arith.constant 0 : index
    %c0_13 = arith.constant 0 : index
    %15 = vector.load %arg6[%c0_12, %c0_13] : memref<128x128xf32, #tpu.memory_space<vmem>>, vector<128x128xf32>
    %cst_14 = arith.constant dense<0.000000e+00> : vector<8x128xf32>
    %16 = tpu.matmul %14, %15, %cst_14 {dimension_numbers = #tpu.dot_dimension_numbers<[1], [0], [0], [1], [0, 0, 1, 1], [], []>} : vector<8x128xf32>, vector<128x128xf32>, vector<8x128xf32> -> vector<8x128xf32>
    %c0_15 = arith.constant 0 : index
    %c0_16 = arith.constant 0 : index
    %17 = vector.load %arg7[%c0_15, %c0_16] : memref<1x128xf32, #tpu.memory_space<vmem>>, vector<1x128xf32>
    %18 = vector.broadcast %17 : vector<1x128xf32> to vector<8x128xf32>
    %19 = arith.addf %16, %18 : vector<8x128xf32>
    %cst_17 = arith.constant 0.000000e+00 : f32
    %20 = vector.broadcast %cst_17 : f32 to vector<8x128xf32>
    %21 = arith.maximumf %19, %20 : vector<8x128xf32>
    %c0_18 = arith.constant 0 : index
    %c0_19 = arith.constant 0 : index
    %22 = vector.load %arg8[%c0_18, %c0_19] : memref<128x128xf32, #tpu.memory_space<vmem>>, vector<128x128xf32>
    %cst_20 = arith.constant dense<0.000000e+00> : vector<8x128xf32>
    %23 = tpu.matmul %21, %22, %cst_20 {dimension_numbers = #tpu.dot_dimension_numbers<[1], [0], [0], [1], [0, 0, 1, 1], [], []>} : vector<8x128xf32>, vector<128x128xf32>, vector<8x128xf32> -> vector<8x128xf32>
    %c0_21 = arith.constant 0 : index
    %c0_22 = arith.constant 0 : index
    %24 = vector.load %arg9[%c0_21, %c0_22] : memref<1x128xf32, #tpu.memory_space<vmem>>, vector<1x128xf32>
    %25 = vector.broadcast %24 : vector<1x128xf32> to vector<8x128xf32>
    %26 = arith.addf %23, %25 : vector<8x128xf32>
    %c0_23 = arith.constant 0 : index
    %c0_24 = arith.constant 0 : index
    %27 = vector.load %arg10[%c0_23, %c0_24] : memref<8x128xf32, #tpu.memory_space<vmem>>, vector<8x128xf32>
    tpu.vector_store %arg10[%c0_23, %c0_24], %26 {strides = array<i32>} : memref<8x128xf32, #tpu.memory_space<vmem>>, vector<8x128xf32>,
    return
  }
  func.func @transform_0(%arg0: i32) -> (i32, i32) {
    %c0_i32 = arith.constant 0 : i32
    %c0_i32_0 = arith.constant 0 : i32
    return %arg0, %c0_i32 : i32, i32
  }
  func.func @transform_1(%arg0: i32) -> (i32, i32) {
    %c0_i32 = arith.constant 0 : i32
    %c0_i32_0 = arith.constant 0 : i32
    %c0_i32_1 = arith.constant 0 : i32
    return %c0_i32, %c0_i32_0 : i32, i32
  }
  func.func @transform_2(%arg0: i32) -> (i32, i32) {
    %c0_i32 = arith.constant 0 : i32
    %c0_i32_0 = arith.constant 0 : i32
    %c0_i32_1 = arith.constant 0 : i32
    return %c0_i32, %c0_i32_0 : i32, i32
  }
  func.func @transform_3(%arg0: i32) -> (i32, i32) {
    %c0_i32 = arith.constant 0 : i32
    %c0_i32_0 = arith.constant 0 : i32
    %c0_i32_1 = arith.constant 0 : i32
    return %c0_i32, %c0_i32_0 : i32, i32
  }
  func.func @transform_4(%arg0: i32) -> (i32, i32) {
    %c0_i32 = arith.constant 0 : i32
    %c0_i32_0 = arith.constant 0 : i32
    %c0_i32_1 = arith.constant 0 : i32
    return %c0_i32, %c0_i32_0 : i32, i32
  }
  func.func @transform_5(%arg0: i32) -> (i32, i32) {
    %c0_i32 = arith.constant 0 : i32
    %c0_i32_0 = arith.constant 0 : i32
    %c0_i32_1 = arith.constant 0 : i32
    return %c0_i32, %c0_i32_0 : i32, i32
  }
  func.func @transform_6(%arg0: i32) -> (i32, i32) {
    %c0_i32 = arith.constant 0 : i32
    %c0_i32_0 = arith.constant 0 : i32
    %c0_i32_1 = arith.constant 0 : i32
    return %c0_i32, %c0_i32_0 : i32, i32
  }
  func.func @transform_7(%arg0: i32) -> (i32, i32) {
    %c0_i32 = arith.constant 0 : i32
    %c0_i32_0 = arith.constant 0 : i32
    %c0_i32_1 = arith.constant 0 : i32
    return %c0_i32, %c0_i32_0 : i32, i32
  }
  func.func @transform_8(%arg0: i32) -> (i32, i32) {
    %c0_i32 = arith.constant 0 : i32
    %c0_i32_0 = arith.constant 0 : i32
    %c0_i32_1 = arith.constant 0 : i32
    return %c0_i32, %c0_i32_0 : i32, i32
  }
  func.func @transform_9(%arg0: i32) -> (i32, i32) {
    %c0_i32 = arith.constant 0 : i32
    %c0_i32_0 = arith.constant 0 : i32
    return %arg0, %c0_i32 : i32, i32
  }
}

</mosaic_0001>

<llo_original>
// kernel: tpu_custom_call.1
$region0: #{tpu_custom_call.1}
  #allocation0 [shape = 'u32[]', space=smem, size = 0x4, offset = 0x4, fixed_abs, tag = 'smem constant byte address 0x4 - core index']
  #allocation1 [shape = 'u32[144,128]{1,0:T(1,128)}', space=vmem, size = 0x12000, scoped, tag = 'internal scratch']
  %s0 = inlined_call_operand.hbm [shape: f32[8,16], index: 0, kind: input, shape index: {}]
  %s1 = inlined_call_operand.hbm [shape: f32[16,128], index: 1, kind: input, shape index: {}]
  %s2 = inlined_call_operand.vmem [shape: f32[1,128], index: 2, kind: input, shape index: {}]
  %s3 = inlined_call_operand.hbm [shape: f32[128,128], index: 3, kind: input, shape index: {}]
  %s4 = inlined_call_operand.vmem [shape: f32[1,128], index: 4, kind: input, shape index: {}]
  %s5 = inlined_call_operand.hbm [shape: f32[128,128], index: 5, kind: input, shape index: {}]
  %s6 = inlined_call_operand.vmem [shape: f32[1,128], index: 6, kind: input, shape index: {}]
  %s7 = inlined_call_operand.hbm [shape: f32[128,128], index: 7, kind: input, shape index: {}]
  %s8 = inlined_call_operand.vmem [shape: f32[1,128], index: 8, kind: input, shape index: {}]
  %s9 = inlined_call_operand.hbm [shape: f32[8,128], index: 9, kind: output, shape index: {}]
  %s10 = sld [smem:[#allocation0]]
  $region66: #{tpu_custom_call.1} parent=0
    _
  %s12 = ssub.s32 1, %s10
  %s13 = scalar_select 0, %s12, %s10
  $region1: #{tpu_custom_call.1} parent=0
    #allocation2 [shape = 'u8[4096]{0}', space=vmem, size = 0x1000, scoped, tag = 'input window, operand 0, single buffered']
    #allocation3 [shape = 's32[1]{0}', space=sflag, size = 0x4, scoped, tag = 'scoped memory for tpu_custom_call.1']
    #allocation4 [shape = 's32[1]{0}', space=sflag, size = 0x4, scoped, tag = 'scoped memory for tpu_custom_call.1']
    #allocation5 [shape = 'u8[8192]{0}', space=vmem, size = 0x2000, scoped, tag = 'input window, operand 1, single buffered']
    #allocation6 [shape = 's32[1]{0}', space=sflag, size = 0x4, scoped, tag = 'scoped memory for tpu_custom_call.1']
    #allocation7 [shape = 'u8[65536]{0}', space=vmem, size = 0x10000, scoped, tag = 'input window, operand 3, single buffered']
    #allocation8 [shape = 'u8[65536]{0}', space=vmem, size = 0x10000, scoped, tag = 'input window, operand 5, single buffered']
    #allocation9 [shape = 's32[1]{0}', space=sflag, size = 0x4, scoped, tag = 'scoped memory for tpu_custom_call.1']
    #allocation10 [shape = 'u8[65536]{0}', space=vmem, size = 0x10000, scoped, tag = 'input window, operand 7, single buffered']
    #allocation11 [shape = 'u8[4096]{0}', space=vmem, size = 0x1000, scoped, tag = 'output window, operand 0, single buffered']
    %14 = vsyncpa [#allocation3], 0
    %15 = vsyncpa [#allocation6], 0
    %16 = vsyncpa [#allocation9], 0
    %17 = vsyncpa [#allocation4], 0
    // Predicated region
    $region2: #{tpu_custom_call.1} parent=1 // pred_check
      _
    $region3: #{tpu_custom_call.1} parent=1 // pred_check_branch
      %19 = sbr.rel (0) target = $region5
    $region4: #{tpu_custom_call.1} parent=1 // pred_region
      %s21 = ssub.s32 128, 128
      %22 = vsyncadd [#allocation3], %s21
      %s24 = sshll.u32 [#allocation2], 4
      %s25 = int_to_ptr.vmem [resolvable:$true] %s24
      %27 = dma.hbm_to_vmem [thread:$0]  %s0, 128, %s25, [#allocation3]
    $region5: #{tpu_custom_call.1} parent=1 // pred_fallthru
      _
    // Predicated region
    $region6: #{tpu_custom_call.1} parent=1 // pred_check
      _
    $region7: #{tpu_custom_call.1} parent=1 // pred_check_branch
      %29 = sbr.rel (0) target = $region9
    $region8: #{tpu_custom_call.1} parent=1 // pred_region
      %s31 = ssub.s32 256, 256
      %32 = vsyncadd [#allocation6], %s31
      %s33 = sshll.u32 [#allocation5], 4
      %s34 = int_to_ptr.vmem [resolvable:$true] %s33
      %39 = dma.hbm_to_vmem [thread:$0]  %s1, 256, %s34, [#allocation6], 128, 128, 8
    $region9: #{tpu_custom_call.1} parent=1 // pred_fallthru
      _
    // Predicated region
    $region10: #{tpu_custom_call.1} parent=1 // pred_check
      _
    $region11: #{tpu_custom_call.1} parent=1 // pred_check_branch
      %41 = sbr.rel (0) target = $region13
    $region12: #{tpu_custom_call.1} parent=1 // pred_region
      _
    $region13: #{tpu_custom_call.1} parent=1 // pred_fallthru
      _
    // Predicated region
    $region14: #{tpu_custom_call.1} parent=1 // pred_check
      _
    $region15: #{tpu_custom_call.1} parent=1 // pred_check_branch
      %43 = sbr.rel (0) target = $region17
    $region16: #{tpu_custom_call.1} parent=1 // pred_region
      %s45 = ssub.s32 2048, 2048
      %46 = vsyncadd [#allocation6], %s45
      %s47 = sshll.u32 [#allocation7], 4
      %s48 = int_to_ptr.vmem [resolvable:$true] %s47
      %53 = dma.hbm_to_vmem [thread:$0]  %s3, 2048, %s48, [#allocation6], 128, 128, 8
    $region17: #{tpu_custom_call.1} parent=1 // pred_fallthru
      _
    // Predicated region
    $region18: #{tpu_custom_call.1} parent=1 // pred_check
      _
    $region19: #{tpu_custom_call.1} parent=1 // pred_check_branch
      %55 = sbr.rel (0) target = $region21
    $region20: #{tpu_custom_call.1} parent=1 // pred_region
      _
    $region21: #{tpu_custom_call.1} parent=1 // pred_fallthru
      _
    // Predicated region
    $region22: #{tpu_custom_call.1} parent=1 // pred_check
      _
    $region23: #{tpu_custom_call.1} parent=1 // pred_check_branch
      %57 = sbr.rel (0) target = $region25
    $region24: #{tpu_custom_call.1} parent=1 // pred_region
      %s59 = ssub.s32 2048, 2048
      %60 = vsyncadd [#allocation9], %s59
      %s61 = sshll.u32 [#allocation8], 4
      %s62 = int_to_ptr.vmem [resolvable:$true] %s61
      %67 = dma.hbm_to_vmem [thread:$0]  %s5, 2048, %s62, [#allocation9], 128, 128, 8
    $region25: #{tpu_custom_call.1} parent=1 // pred_fallthru
      _
    // Predicated region
    $region26: #{tpu_custom_call.1} parent=1 // pred_check
      _
    $region27: #{tpu_custom_call.1} parent=1 // pred_check_branch
      %69 = sbr.rel (0) target = $region29
    $region28: #{tpu_custom_call.1} parent=1 // pred_region
      _
    $region29: #{tpu_custom_call.1} parent=1 // pred_fallthru
      _
    // Predicated region
    $region30: #{tpu_custom_call.1} parent=1 // pred_check
      _
    $region31: #{tpu_custom_call.1} parent=1 // pred_check_branch
      %71 = sbr.rel (0) target = $region33
    $region32: #{tpu_custom_call.1} parent=1 // pred_region
      %s73 = ssub.s32 2048, 2048
      %74 = vsyncadd [#allocation9], %s73
      %s75 = sshll.u32 [#allocation10], 4
      %s76 = int_to_ptr.vmem [resolvable:$true] %s75
      %81 = dma.hbm_to_vmem [thread:$0]  %s7, 2048, %s76, [#allocation9], 128, 128, 8
    $region33: #{tpu_custom_call.1} parent=1 // pred_fallthru
      _
    // Predicated region
    $region34: #{tpu_custom_call.1} parent=1 // pred_check
      _
    $region35: #{tpu_custom_call.1} parent=1 // pred_check_branch
      %83 = sbr.rel (0) target = $region37
    $region36: #{tpu_custom_call.1} parent=1 // pred_region
      _
    $region37: #{tpu_custom_call.1} parent=1 // pred_fallthru
      _
    // Predicated region
    $region38: #{tpu_custom_call.1} parent=1 // pred_check
      _
    $region39: #{tpu_custom_call.1} parent=1 // pred_check_branch
      %85 = sbr.rel (0) target = $region41
    $region40: #{tpu_custom_call.1} parent=1 // pred_region
      %86 = dma.done [#allocation3], 128
    $region41: #{tpu_custom_call.1} parent=1 // pred_fallthru
      _
    // Predicated region
    $region42: #{tpu_custom_call.1} parent=1 // pred_check
      _
    $region43: #{tpu_custom_call.1} parent=1 // pred_check_branch
      %88 = sbr.rel (0) target = $region45
    $region44: #{tpu_custom_call.1} parent=1 // pred_region
      %89 = dma.done [#allocation6], 256
    $region45: #{tpu_custom_call.1} parent=1 // pred_fallthru
      _
    // Predicated region
    $region46: #{tpu_custom_call.1} parent=1 // pred_check
      _
    $region47: #{tpu_custom_call.1} parent=1 // pred_check_branch
      %91 = sbr.rel (0) target = $region49
    $region48: #{tpu_custom_call.1} parent=1 // pred_region
      %92 = dma.done [#allocation6], 2048
    $region49: #{tpu_custom_call.1} parent=1 // pred_fallthru
      _
    // Predicated region
    $region50: #{tpu_custom_call.1} parent=1 // pred_check
      _
    $region51: #{tpu_custom_call.1} parent=1 // pred_check_branch
      %94 = sbr.rel (0) target = $region53
    $region52: #{tpu_custom_call.1} parent=1 // pred_region
      %95 = dma.done [#allocation9], 2048
    $region53: #{tpu_custom_call.1} parent=1 // pred_fallthru
      _
    // Predicated region
    $region54: #{tpu_custom_call.1} parent=1 // pred_check
      _
    $region55: #{tpu_custom_call.1} parent=1 // pred_check_branch
      %97 = sbr.rel (0) target = $region57
    $region56: #{tpu_custom_call.1} parent=1 // pred_region
      %98 = dma.done [#allocation9], 2048
    $region57: #{tpu_custom_call.1} parent=1 // pred_fallthru
      _
    %v99 = vld [vmem:[#allocation2] sm:$0xff]
    %v100 = vld [vmem:[#allocation5] sm:$0xff]
    %v101 = vld [vmem:[#allocation5 + $0x8] sm:$0xff]
    %v102 = vld [vmem:[%s2] sm:$0x1]
    %v104 = vlaneseq
    %v105 = vshrl.u32 %v104, 7
    %v106 = vsub.s32 0, %v105
    %v107 = vrot.slane %v102, %v106
    %vm109 = vcmask 130048
    %v111 = vsel %vm109, %v99, 0
    %113 = vmatprep.subr.mxu0 0.0
    %114 = vmatpush1.msra.mxu0 %v100
    %115 = vmatprep.subr.mxu0 0.0
    %116 = vmatpush1.msra.mxu0 %v101
    %117 = vmatprep.subr.mxu0 0.0
    %118 = vmatpush1.msra.mxu0 0.0
    %119 = vmatprep.subr.mxu0 0.0
    %120 = vmatpush1.msra.mxu0 0.0
    %121 = vmatprep.subr.mxu0 0.0
    %122 = vmatpush1.msra.mxu0 0.0
    %123 = vmatprep.subr.mxu0 0.0
    %124 = vmatpush1.msra.mxu0 0.0
    %125 = vmatprep.subr.mxu0 0.0
    %126 = vmatpush1.msra.mxu0 0.0
    %127 = vmatprep.subr.mxu0 0.0
    %128 = vmatpush1.msra.mxu0 0.0
    %129 = vmatprep.subr.mxu0 0.0
    %130 = vmatpush1.msra.mxu0 0.0
    %131 = vmatprep.subr.mxu0 0.0
    %132 = vmatpush1.msra.mxu0 0.0
    %133 = vmatprep.subr.mxu0 0.0
    %134 = vmatpush1.msra.mxu0 0.0
    %135 = vmatprep.subr.mxu0 0.0
    %136 = vmatpush1.msra.mxu0 0.0
    %137 = vmatprep.subr.mxu0 0.0
    %138 = vmatpush1.msra.mxu0 0.0
    %139 = vmatprep.subr.mxu0 0.0
    %140 = vmatpush1.msra.mxu0 0.0
    %141 = vmatprep.subr.mxu0 0.0
    %142 = vmatpush1.msra.mxu0 0.0
    %143 = vmatprep.subr.mxu0 0.0
    %144 = vmatpush1.msra.mxu0 0.0
    %145 = vmatprep.subr.mxu0 0.0
    %146 = vmatpush1.msra.mxu0 0.0
    %147 = vmatprep.subr.mxu0 0.0
    %148 = vmatpush1.msra.mxu0 0.0
    %149 = vmatprep.subr.mxu0 0.0
    %150 = vmatpush1.msra.mxu0 0.0
    %151 = vmatprep.subr.mxu0 0.0
    %152 = vmatpush1.msra.mxu0 0.0
    %153 = vmatprep.subr.mxu0 0.0
    %154 = vmatpush1.msra.mxu0 0.0
    %155 = vmatprep.subr.mxu0 0.0
    %156 = vmatpush1.msra.mxu0 0.0
    %157 = vmatprep.subr.mxu0 0.0
    %158 = vmatpush1.msra.mxu0 0.0
    %159 = vmatprep.subr.mxu0 0.0
    %160 = vmatpush1.msra.mxu0 0.0
    %161 = vmatprep.subr.mxu0 0.0
    %162 = vmatpush1.msra.mxu0 0.0
    %163 = vmatprep.subr.mxu0 0.0
    %164 = vmatpush1.msra.mxu0 0.0
    %165 = vmatprep.subr.mxu0 0.0
    %166 = vmatpush1.msra.mxu0 0.0
    %167 = vmatprep.subr.mxu0 0.0
    %168 = vmatpush1.msra.mxu0 0.0
    %169 = vmatprep.subr.mxu0 0.0
    %170 = vmatpush1.msra.mxu0 0.0
    %171 = vmatprep.subr.mxu0 0.0
    %172 = vmatpush1.msra.mxu0 0.0
    %173 = vmatprep.subr.mxu0 0.0
    %174 = vmatpush1.msra.mxu0 0.0
    %175 = vmatprep.subr.mxu0 0.0
    %176 = vmatpush1.msra.mxu0 0.0
    %177 = vmatprep.mubr.f32.mxu0 0.0
    %178 = vmatmul.mubr.f32.gmra.mrb[0].mxu0 %v111
    %v179 = vpop.f32.mrb[0].mxu0
    %v180 = vadd.f32 %v107, %v179
    %v181 = vpop.f32.mrb[0].mxu0
    %182 = vdwg.mxu0
    %v183 = vmax.f32 %v180, 0.0
    %v184 = vld [vmem:[#allocation7] sm:$0xff]
    %v185 = vld [vmem:[#allocation7 + $0x8] sm:$0xff]
    %v186 = vld [vmem:[#allocation7 + $0x10] sm:$0xff]
    %v187 = vld [vmem:[#allocation7 + $0x18] sm:$0xff]
    %v188 = vld [vmem:[#allocation7 + $0x20] sm:$0xff]
    %v189 = vld [vmem:[#allocation7 + $0x28] sm:$0xff]
    %v190 = vld [vmem:[#allocation7 + $0x30] sm:$0xff]
    %v191 = vld [vmem:[#allocation7 + $0x38] sm:$0xff]
    %v192 = vld [vmem:[#allocation7 + $0x40] sm:$0xff]
    %v193 = vld [vmem:[#allocation7 + $0x48] sm:$0xff]
    %v194 = vld [vmem:[#allocation7 + $0x50] sm:$0xff]
    %v195 = vld [vmem:[#allocation7 + $0x58] sm:$0xff]
    %v196 = vld [vmem:[#allocation7 + $0x60] sm:$0xff]
    %v197 = vld [vmem:[#allocation7 + $0x68] sm:$0xff]
    %v198 = vld [vmem:[#allocation7 + $0x70] sm:$0xff]
    %v199 = vld [vmem:[#allocation7 + $0x78] sm:$0xff]
    %v200 = vld [vmem:[%s4] sm:$0x1]
    %v202 = vlaneseq
    %v203 = vshrl.u32 %v202, 7
    %v204 = vsub.s32 0, %v203
    %v205 = vrot.slane %v200, %v204
    %207 = vmatprep.subr.mxu0 0.0
    %208 = vmatpush1.msra.mxu0 %v184
    %209 = vmatprep.subr.mxu0 0.0
    %210 = vmatpush1.msra.mxu0 %v185
    %211 = vmatprep.subr.mxu0 0.0
    %212 = vmatpush1.msra.mxu0 %v186
    %213 = vmatprep.subr.mxu0 0.0
    %214 = vmatpush1.msra.mxu0 %v187
    %215 = vmatprep.subr.mxu0 0.0
    %216 = vmatpush1.msra.mxu0 %v188
    %217 = vmatprep.subr.mxu0 0.0
    %218 = vmatpush1.msra.mxu0 %v189
    %219 = vmatprep.subr.mxu0 0.0
    %220 = vmatpush1.msra.mxu0 %v190
    %221 = vmatprep.subr.mxu0 0.0
    %222 = vmatpush1.msra.mxu0 %v191
    %223 = vmatprep.subr.mxu0 0.0
    %224 = vmatpush1.msra.mxu0 %v192
    %225 = vmatprep.subr.mxu0 0.0
    %226 = vmatpush1.msra.mxu0 %v193
    %227 = vmatprep.subr.mxu0 0.0
    %228 = vmatpush1.msra.mxu0 %v194
    %229 = vmatprep.subr.mxu0 0.0
    %230 = vmatpush1.msra.mxu0 %v195
    %231 = vmatprep.subr.mxu0 0.0
    %232 = vmatpush1.msra.mxu0 %v196
    %233 = vmatprep.subr.mxu0 0.0
    %234 = vmatpush1.msra.mxu0 %v197
    %235 = vmatprep.subr.mxu0 0.0
    %236 = vmatpush1.msra.mxu0 %v198
    %237 = vmatprep.subr.mxu0 0.0
    %238 = vmatpush1.msra.mxu0 %v199
    %239 = vmatprep.subr.mxu0 0.0
    %240 = vmatpush1.msra.mxu0 0.0
    %241 = vmatprep.subr.mxu0 0.0
    %242 = vmatpush1.msra.mxu0 0.0
    %243 = vmatprep.subr.mxu0 0.0
    %244 = vmatpush1.msra.mxu0 0.0
    %245 = vmatprep.subr.mxu0 0.0
    %246 = vmatpush1.msra.mxu0 0.0
    %247 = vmatprep.subr.mxu0 0.0
    %248 = vmatpush1.msra.mxu0 0.0
    %249 = vmatprep.subr.mxu0 0.0
    %250 = vmatpush1.msra.mxu0 0.0
    %251 = vmatprep.subr.mxu0 0.0
    %252 = vmatpush1.msra.mxu0 0.0
    %253 = vmatprep.subr.mxu0 0.0
    %254 = vmatpush1.msra.mxu0 0.0
    %255 = vmatprep.subr.mxu0 0.0
    %256 = vmatpush1.msra.mxu0 0.0
    %257 = vmatprep.subr.mxu0 0.0
    %258 = vmatpush1.msra.mxu0 0.0
    %259 = vmatprep.subr.mxu0 0.0
    %260 = vmatpush1.msra.mxu0 0.0
    %261 = vmatprep.subr.mxu0 0.0
    %262 = vmatpush1.msra.mxu0 0.0
    %263 = vmatprep.subr.mxu0 0.0
    %264 = vmatpush1.msra.mxu0 0.0
    %265 = vmatprep.subr.mxu0 0.0
    %266 = vmatpush1.msra.mxu0 0.0
    %267 = vmatprep.subr.mxu0 0.0
    %268 = vmatpush1.msra.mxu0 0.0
    %269 = vmatprep.subr.mxu0 0.0
    %270 = vmatpush1.msra.mxu0 0.0
    %271 = vmatprep.mubr.f32.mxu0 0.0
    %272 = vmatmul.mubr.f32.gmra.mrb[0].mxu0 %v183
    %v273 = vpop.f32.mrb[0].mxu0
    %v274 = vadd.f32 %v205, %v273
    %v275 = vpop.f32.mrb[0].mxu0
    %276 = vdwg.mxu0
    %v277 = vmax.f32 %v274, 0.0
    %v278 = vld [vmem:[#allocation8] sm:$0xff]
    %v279 = vld [vmem:[#allocation8 + $0x8] sm:$0xff]
    %v280 = vld [vmem:[#allocation8 + $0x10] sm:$0xff]
    %v281 = vld [vmem:[#allocation8 + $0x18] sm:$0xff]
    %v282 = vld [vmem:[#allocation8 + $0x20] sm:$0xff]
    %v283 = vld [vmem:[#allocation8 + $0x28] sm:$0xff]
    %v284 = vld [vmem:[#allocation8 + $0x30] sm:$0xff]
    %v285 = vld [vmem:[#allocation8 + $0x38] sm:$0xff]
    %v286 = vld [vmem:[#allocation8 + $0x40] sm:$0xff]
    %v287 = vld [vmem:[#allocation8 + $0x48] sm:$0xff]
    %v288 = vld [vmem:[#allocation8 + $0x50] sm:$0xff]
    %v289 = vld [vmem:[#allocation8 + $0x58] sm:$0xff]
    %v290 = vld [vmem:[#allocation8 + $0x60] sm:$0xff]
    %v291 = vld [vmem:[#allocation8 + $0x68] sm:$0xff]
    %v292 = vld [vmem:[#allocation8 + $0x70] sm:$0xff]
    %v293 = vld [vmem:[#allocation8 + $0x78] sm:$0xff]
    %v294 = vld [vmem:[%s6] sm:$0x1]
    %v296 = vlaneseq
    %v297 = vshrl.u32 %v296, 7
    %v298 = vsub.s32 0, %v297
    %v299 = vrot.slane %v294, %v298
    %301 = vmatprep.subr.mxu0 0.0
    %302 = vmatpush1.msra.mxu0 %v278
    %303 = vmatprep.subr.mxu0 0.0
    %304 = vmatpush1.msra.mxu0 %v279
    %305 = vmatprep.subr.mxu0 0.0
    %306 = vmatpush1.msra.mxu0 %v280
    %307 = vmatprep.subr.mxu0 0.0
    %308 = vmatpush1.msra.mxu0 %v281
    %309 = vmatprep.subr.mxu0 0.0
    %310 = vmatpush1.msra.mxu0 %v282
    %311 = vmatprep.subr.mxu0 0.0
    %312 = vmatpush1.msra.mxu0 %v283
    %313 = vmatprep.subr.mxu0 0.0
    %314 = vmatpush1.msra.mxu0 %v284
    %315 = vmatprep.subr.mxu0 0.0
    %316 = vmatpush1.msra.mxu0 %v285
    %317 = vmatprep.subr.mxu0 0.0
    %318 = vmatpush1.msra.mxu0 %v286
    %319 = vmatprep.subr.mxu0 0.0
    %320 = vmatpush1.msra.mxu0 %v287
    %321 = vmatprep.subr.mxu0 0.0
    %322 = vmatpush1.msra.mxu0 %v288
    %323 = vmatprep.subr.mxu0 0.0
    %324 = vmatpush1.msra.mxu0 %v289
    %325 = vmatprep.subr.mxu0 0.0
    %326 = vmatpush1.msra.mxu0 %v290
    %327 = vmatprep.subr.mxu0 0.0
    %328 = vmatpush1.msra.mxu0 %v291
    %329 = vmatprep.subr.mxu0 0.0
    %330 = vmatpush1.msra.mxu0 %v292
    %331 = vmatprep.subr.mxu0 0.0
    %332 = vmatpush1.msra.mxu0 %v293
    %333 = vmatprep.subr.mxu0 0.0
    %334 = vmatpush1.msra.mxu0 0.0
    %335 = vmatprep.subr.mxu0 0.0
    %336 = vmatpush1.msra.mxu0 0.0
    %337 = vmatprep.subr.mxu0 0.0
    %338 = vmatpush1.msra.mxu0 0.0
    %339 = vmatprep.subr.mxu0 0.0
    %340 = vmatpush1.msra.mxu0 0.0
    %341 = vmatprep.subr.mxu0 0.0
    %342 = vmatpush1.msra.mxu0 0.0
    %343 = vmatprep.subr.mxu0 0.0
    %344 = vmatpush1.msra.mxu0 0.0
    %345 = vmatprep.subr.mxu0 0.0
    %346 = vmatpush1.msra.mxu0 0.0
    %347 = vmatprep.subr.mxu0 0.0
    %348 = vmatpush1.msra.mxu0 0.0
    %349 = vmatprep.subr.mxu0 0.0
    %350 = vmatpush1.msra.mxu0 0.0
    %351 = vmatprep.subr.mxu0 0.0
    %352 = vmatpush1.msra.mxu0 0.0
    %353 = vmatprep.subr.mxu0 0.0
    %354 = vmatpush1.msra.mxu0 0.0
    %355 = vmatprep.subr.mxu0 0.0
    %356 = vmatpush1.msra.mxu0 0.0
    %357 = vmatprep.subr.mxu0 0.0
    %358 = vmatpush1.msra.mxu0 0.0
    %359 = vmatprep.subr.mxu0 0.0
    %360 = vmatpush1.msra.mxu0 0.0
    %361 = vmatprep.subr.mxu0 0.0
    %362 = vmatpush1.msra.mxu0 0.0
    %363 = vmatprep.subr.mxu0 0.0
    %364 = vmatpush1.msra.mxu0 0.0
    %365 = vmatprep.mubr.f32.mxu0 0.0
    %366 = vmatmul.mubr.f32.gmra.mrb[0].mxu0 %v277
    %v367 = vpop.f32.mrb[0].mxu0
    %v368 = vadd.f32 %v299, %v367
    %v369 = vpop.f32.mrb[0].mxu0
    %370 = vdwg.mxu0
    %v371 = vmax.f32 %v368, 0.0
    %v372 = vld [vmem:[#allocation10] sm:$0xff]
    %v373 = vld [vmem:[#allocation10 + $0x8] sm:$0xff]
    %v374 = vld [vmem:[#allocation10 + $0x10] sm:$0xff]
    %v375 = vld [vmem:[#allocation10 + $0x18] sm:$0xff]
    %v376 = vld [vmem:[#allocation10 + $0x20] sm:$0xff]
    %v377 = vld [vmem:[#allocation10 + $0x28] sm:$0xff]
    %v378 = vld [vmem:[#allocation10 + $0x30] sm:$0xff]
    %v379 = vld [vmem:[#allocation10 + $0x38] sm:$0xff]
    %v380 = vld [vmem:[#allocation10 + $0x40] sm:$0xff]
    %v381 = vld [vmem:[#allocation10 + $0x48] sm:$0xff]
    %v382 = vld [vmem:[#allocation10 + $0x50] sm:$0xff]
    %v383 = vld [vmem:[#allocation10 + $0x58] sm:$0xff]
    %v384 = vld [vmem:[#allocation10 + $0x60] sm:$0xff]
    %v385 = vld [vmem:[#allocation10 + $0x68] sm:$0xff]
    %v386 = vld [vmem:[#allocation10 + $0x70] sm:$0xff]
    %v387 = vld [vmem:[#allocation10 + $0x78] sm:$0xff]
    %v388 = vld [vmem:[%s8] sm:$0x1]
    %v390 = vlaneseq
    %v391 = vshrl.u32 %v390, 7
    %v392 = vsub.s32 0, %v391
    %v393 = vrot.slane %v388, %v392
    %395 = vmatprep.subr.mxu0 0.0
    %396 = vmatpush1.msra.mxu0 %v372
    %397 = vmatprep.subr.mxu0 0.0
    %398 = vmatpush1.msra.mxu0 %v373
    %399 = vmatprep.subr.mxu0 0.0
    %400 = vmatpush1.msra.mxu0 %v374
    %401 = vmatprep.subr.mxu0 0.0
    %402 = vmatpush1.msra.mxu0 %v375
    %403 = vmatprep.subr.mxu0 0.0
    %404 = vmatpush1.msra.mxu0 %v376
    %405 = vmatprep.subr.mxu0 0.0
    %406 = vmatpush1.msra.mxu0 %v377
    %407 = vmatprep.subr.mxu0 0.0
    %408 = vmatpush1.msra.mxu0 %v378
    %409 = vmatprep.subr.mxu0 0.0
    %410 = vmatpush1.msra.mxu0 %v379
    %411 = vmatprep.subr.mxu0 0.0
    %412 = vmatpush1.msra.mxu0 %v380
    %413 = vmatprep.subr.mxu0 0.0
    %414 = vmatpush1.msra.mxu0 %v381
    %415 = vmatprep.subr.mxu0 0.0
    %416 = vmatpush1.msra.mxu0 %v382
    %417 = vmatprep.subr.mxu0 0.0
    %418 = vmatpush1.msra.mxu0 %v383
    %419 = vmatprep.subr.mxu0 0.0
    %420 = vmatpush1.msra.mxu0 %v384
    %421 = vmatprep.subr.mxu0 0.0
    %422 = vmatpush1.msra.mxu0 %v385
    %423 = vmatprep.subr.mxu0 0.0
    %424 = vmatpush1.msra.mxu0 %v386
    %425 = vmatprep.subr.mxu0 0.0
    %426 = vmatpush1.msra.mxu0 %v387
    %427 = vmatprep.subr.mxu0 0.0
    %428 = vmatpush1.msra.mxu0 0.0
    %429 = vmatprep.subr.mxu0 0.0
    %430 = vmatpush1.msra.mxu0 0.0
    %431 = vmatprep.subr.mxu0 0.0
    %432 = vmatpush1.msra.mxu0 0.0
    %433 = vmatprep.subr.mxu0 0.0
    %434 = vmatpush1.msra.mxu0 0.0
    %435 = vmatprep.subr.mxu0 0.0
    %436 = vmatpush1.msra.mxu0 0.0
    %437 = vmatprep.subr.mxu0 0.0
    %438 = vmatpush1.msra.mxu0 0.0
    %439 = vmatprep.subr.mxu0 0.0
    %440 = vmatpush1.msra.mxu0 0.0
    %441 = vmatprep.subr.mxu0 0.0
    %442 = vmatpush1.msra.mxu0 0.0
    %443 = vmatprep.subr.mxu0 0.0
    %444 = vmatpush1.msra.mxu0 0.0
    %445 = vmatprep.subr.mxu0 0.0
    %446 = vmatpush1.msra.mxu0 0.0
    %447 = vmatprep.subr.mxu0 0.0
    %448 = vmatpush1.msra.mxu0 0.0
    %449 = vmatprep.subr.mxu0 0.0
    %450 = vmatpush1.msra.mxu0 0.0
    %451 = vmatprep.subr.mxu0 0.0
    %452 = vmatpush1.msra.mxu0 0.0
    %453 = vmatprep.subr.mxu0 0.0
    %454 = vmatpush1.msra.mxu0 0.0
    %455 = vmatprep.subr.mxu0 0.0
    %456 = vmatpush1.msra.mxu0 0.0
    %457 = vmatprep.subr.mxu0 0.0
    %458 = vmatpush1.msra.mxu0 0.0
    %459 = vmatprep.mubr.f32.mxu0 0.0
    %460 = vmatmul.mubr.f32.gmra.mrb[0].mxu0 %v371
    %v461 = vpop.f32.mrb[0].mxu0
    %v462 = vadd.f32 %v393, %v461
    %v463 = vpop.f32.mrb[0].mxu0
    %464 = vdwg.mxu0
    %465 = vst [vmem:[#allocation11] sm:$0xff] %v462
    // Predicated region
    $region58: #{tpu_custom_call.1} parent=1 // pred_check
      _
    $region59: #{tpu_custom_call.1} parent=1 // pred_check_branch
      %467 = sbr.rel (0) target = $region61
    $region60: #{tpu_custom_call.1} parent=1 // pred_region
      %s469 = ssub.s32 128, 128
      %470 = vsyncadd [#allocation4], %s469
      %s472 = sshll.u32 [#allocation11], 4
      %s473 = int_to_ptr.vmem [resolvable:$true] %s472
      %475 = dma.vmem_to_hbm [thread:$0]  %s473, 128, %s9, [#allocation4]
    $region61: #{tpu_custom_call.1} parent=1 // pred_fallthru
      _
    // Predicated region
    $region62: #{tpu_custom_call.1} parent=1 // pred_check
      _
    $region63: #{tpu_custom_call.1} parent=1 // pred_check_branch
      %477 = sbr.rel (0) target = $region65
    $region64: #{tpu_custom_call.1} parent=1 // pred_region
      %478 = dma.done [#allocation4], 128
    $region65: #{tpu_custom_call.1} parent=1 // pred_fallthru
      _
    %479 = vsyncpa [#allocation3], 1
    %480 = vsyncpa [#allocation6], 1
    %481 = vsyncpa [#allocation9], 1
    %482 = vsyncpa [#allocation4], 1

</llo_original>
